<compile_context>
chip_gen: v5e
topology: v5e:2x2
jax: 0.10.0
libtpu: 0.0.40
codegen_flags: <defaults>
</compile_context>

<pallas_src>
import functools

import jax
import jax.numpy as jnp
from jax import lax
from jax.experimental import pallas as pl
from jax.experimental.pallas import tpu as pltpu


# ---------------------------------------------------------------------------
# Fused attention kernel: one batch element per grid step.
#   refs (in order): x, wq, bq, wk, bk, wv, bv, wo, bo, [mask], out
# ---------------------------------------------------------------------------
def _clip_attn_kernel(x_ref, wq_ref, bq_ref, wk_ref, bk_ref, wv_ref, bv_ref,
                      wo_ref, bo_ref, *rest, num_heads, scale):
    if len(rest) == 2:
        mask_ref, o_ref = rest
    else:
        mask_ref = None
        (o_ref,) = rest

    x = x_ref[0]                                    # (T, D) bf16
    T, D = x.shape
    dh = D // num_heads

    # QKV projections (bf16 MXU inputs, f32 accumulation).
    q = jnp.dot(x, wq_ref[...], preferred_element_type=jnp.float32) + bq_ref[...]
    q = q * scale                                   # torch: (xWq + bq) * scale
    k = jnp.dot(x, wk_ref[...], preferred_element_type=jnp.float32) + bk_ref[...]
    v = jnp.dot(x, wv_ref[...], preferred_element_type=jnp.float32) + bv_ref[...]

    q16 = q.astype(jnp.bfloat16)
    k16 = k.astype(jnp.bfloat16)
    v16 = v.astype(jnp.bfloat16)

    head_outs = []
    for h in range(num_heads):                      # static unroll over heads
        sl = slice(h * dh, (h + 1) * dh)
        qh = q16[:, sl]                             # (T, dh)
        kh = k16[:, sl]                             # (T, dh)
        vh = v16[:, sl]                             # (T, dh)

        # scores[i, j] = q_i . k_j   (contract head_dim, no explicit transpose)
        s = lax.dot_general(qh, kh, (((1,), (1,)), ((), ())),
                            preferred_element_type=jnp.float32)   # (T, T) f32
        if mask_ref is not None:
            s = s + mask_ref[0]

        m = jnp.max(s, axis=-1, keepdims=True)
        p = jnp.exp(s - m)
        l = jnp.sum(p, axis=-1, keepdims=True)
        p = p * pl.reciprocal(l, approx=True)       # softmax, f32
        # TODO(synk): dropout(p=0.1) omitted — eval/inference mode (training=False).

        oh = jnp.dot(p.astype(jnp.bfloat16), vh,
                     preferred_element_type=jnp.float32)          # (T, dh) f32
        head_outs.append(oh)

    attn = jnp.concatenate(head_outs, axis=-1)      # (T, D) f32  (== transpose+reshape in torch)
    out = jnp.dot(attn.astype(jnp.bfloat16), wo_ref[...],
                  preferred_element_type=jnp.float32) + bo_ref[...]
    o_ref[0] = out.astype(o_ref.dtype)


# ---------------------------------------------------------------------------
# Wrapper
# ---------------------------------------------------------------------------
def clip_attention_forward(params, hidden_states, num_heads,
                           attention_mask=None, causal_attention_mask=None,
                           output_attentions=False):
    """hidden_states: (B, T, D) float32. Masks: (B, 1, T, T) additive, or None."""
    B, T, D = hidden_states.shape
    head_dim = D // num_heads
    if head_dim * num_heads != D:
        raise ValueError("embed_dim must be divisible by num_heads")
    scale = head_dim ** -0.5

    x16 = hidden_states.astype(jnp.bfloat16)

    # Combine causal + padding masks into a single additive (B, T, T) mask.
    mask = None
    if causal_attention_mask is not None:
        mask = causal_attention_mask[:, 0].astype(jnp.float32)
    if attention_mask is not None:
        m2 = attention_mask[:, 0].astype(jnp.float32)
        mask = m2 if mask is None else mask + m2

    w_spec = pl.BlockSpec((D, D), lambda b: (0, 0))
    b_spec = pl.BlockSpec((1, D), lambda b: (0, 0))
    in_specs = [pl.BlockSpec((1, T, D), lambda b: (b, 0, 0)),
                w_spec, b_spec, w_spec, b_spec, w_spec, b_spec, w_spec, b_spec]
    args = [x16,
            params["wq"], params["bq"], params["wk"], params["bk"],
            params["wv"], params["bv"], params["wo"], params["bo"]]
    if mask is not None:
        in_specs.append(pl.BlockSpec((1, T, T), lambda b: (b, 0, 0)))
        args.append(mask)

    flops = B * (8 * T * D * D + 4 * T * T * D)
    transcendentals = B * num_heads * T * T
    bytes_accessed = (B * T * D * 2          # x (bf16)
                      + 4 * D * D * 2        # weights (bf16)
                      + 4 * D * 4            # biases (f32)
                      + B * T * D * 4        # out (f32)
                      + (B * T * T * 4 if mask is not None else 0))

    kernel = functools.partial(_clip_attn_kernel, num_heads=num_heads, scale=scale)

    out = pl.pallas_call(
        kernel,
        out_shape=jax.ShapeDtypeStruct((B, T, D), hidden_states.dtype),
        grid_spec=pltpu.PrefetchScalarGridSpec(
            num_scalar_prefetch=0,
            grid=(B,),
            in_specs=in_specs,
            out_specs=pl.BlockSpec((1, T, D), lambda b: (b, 0, 0)),
        ),
        compiler_params=pltpu.CompilerParams(dimension_semantics=("parallel",)),
        cost_estimate=pl.CostEstimate(flops=flops,
                                      transcendentals=transcendentals,
                                      bytes_accessed=bytes_accessed),
    )(*args)

    # TODO(synk): output_attentions=True (materializing per-head attention probs
    # as a second kernel output) not implemented; returns None like the default path.
    return out, None


# ---------------------------------------------------------------------------
# Parameter construction (deterministic). PyTorch Linear (out,in) -> (in,out).
# Weights stored in bf16 (MXU dtype), biases in f32 (added after f32 accumulation).
# ---------------------------------------------------------------------------
def init_clip_attention_params(key, d_model):
    ks = jax.random.split(key, 8)
    s = 0.02

    def lin(kw, kb):
        w = (s * jax.random.normal(kw, (d_model, d_model), jnp.float32)).astype(jnp.bfloat16)
        b = s * jax.random.normal(kb, (1, d_model), jnp.float32)
        return w, b

    p = {}
    p["wq"], p["bq"] = lin(ks[0], ks[1])
    p["wk"], p["bk"] = lin(ks[2], ks[3])
    p["wv"], p["bv"] = lin(ks[4], ks[5])
    p["wo"], p["bo"] = lin(ks[6], ks[7])
    return p


# ---------------------------------------------------------------------------
# Pure-JAX f32 reference mirroring the torch forward (eval mode).
# ---------------------------------------------------------------------------
def _ref_forward(params, x, num_heads, attention_mask=None, causal_attention_mask=None):
    B, T, D = x.shape
    dh = D // num_heads
    scale = dh ** -0.5
    wq = params["wq"].astype(jnp.float32)
    wk = params["wk"].astype(jnp.float32)
    wv = params["wv"].astype(jnp.float32)
    wo = params["wo"].astype(jnp.float32)

    q = (x @ wq + params["bq"]) * scale
    k = x @ wk + params["bk"]
    v = x @ wv + params["bv"]

    def shape(t):
        return t.reshape(B, T, num_heads, dh).transpose(0, 2, 1, 3)   # (B, H, T, dh)

    q, k, v = shape(q), shape(k), shape(v)
    s = jnp.einsum("bhtd,bhsd->bhts", q, k)
    if causal_attention_mask is not None:
        s = s + causal_attention_mask
    if attention_mask is not None:
        s = s + attention_mask
    p = jax.nn.softmax(s, axis=-1)
    o = jnp.einsum("bhts,bhsd->bhtd", p, v)
    o = o.transpose(0, 2, 1, 3).reshape(B, T, D)
    return o @ wo + params["bo"]


if __name__ == "__main__":
    B, T, D, H = 2, 8, 128, 2   # small shapes: batch=2, seq=8, hidden=128, heads=2
    key = jax.random.PRNGKey(0)
    kx, kp = jax.random.split(key, 2)

    params = init_clip_attention_params(kp, D)
    x = jax.random.normal(kx, (B, T, D), jnp.float32)

    # --- no-mask path ------------------------------------------------------
    out, attn_w = clip_attention_forward(params, x, H)
    jax.block_until_ready(out)
    ref = _ref_forward(params, x, H)
    assert attn_w is None
    assert jnp.allclose(out, ref, atol=1e-2, rtol=1e-2), \
        float(jnp.max(jnp.abs(out - ref)))

    # --- causal + padding mask path ----------------------------------------
    neg = jnp.finfo(jnp.float32).min
    causal = jnp.triu(jnp.full((T, T), neg, jnp.float32), k=1)
    causal = jnp.broadcast_to(causal, (B, 1, T, T))
    pad = jnp.zeros((B, 1, T, T), jnp.float32)
    pad = pad.at[1, :, :, T - 2:].set(neg)          # mask last 2 keys of batch 1

    out_m, _ = clip_attention_forward(params, x, H,
                                      attention_mask=pad,
                                      causal_attention_mask=causal)
    jax.block_until_ready(out_m)
    ref_m = _ref_forward(params, x, H,
                         attention_mask=pad, causal_attention_mask=causal)
    assert jnp.allclose(out_m, ref_m, atol=1e-2, rtol=1e-2), \
        float(jnp.max(jnp.abs(out_m - ref_m)))

    print("KERNEL_OK")
</pallas_src>

<mosaic_0001>
module attributes {stable_mosaic.version = 11 : i64} {
  func.func @_clip_attn_kernel(%arg0: i32, %arg1: memref<1x8x128xbf16, #tpu.memory_space<vmem>>, %arg2: memref<128x128xbf16, #tpu.memory_space<vmem>>, %arg3: memref<1x128xf32, #tpu.memory_space<vmem>>, %arg4: memref<128x128xbf16, #tpu.memory_space<vmem>>, %arg5: memref<1x128xf32, #tpu.memory_space<vmem>>, %arg6: memref<128x128xbf16, #tpu.memory_space<vmem>>, %arg7: memref<1x128xf32, #tpu.memory_space<vmem>>, %arg8: memref<128x128xbf16, #tpu.memory_space<vmem>>, %arg9: memref<1x128xf32, #tpu.memory_space<vmem>>, %arg10: memref<1x8x128xf32, #tpu.memory_space<vmem>>) attributes {dimension_semantics = [#tpu.dimension_semantics<parallel>], iteration_bounds = array<i64: 2>, scalar_prefetch = 0 : i64, scratch_operands = 0 : i64, tpu.core_type = #tpu.core_type<tc>, window_params = [{transform_indices = @transform_0, window_bounds = array<i64: 1, 8, 128>}, {pipeline_mode = #tpu.pipeline_mode<synchronous>, transform_indices = @transform_1, window_bounds = array<i64: 128, 128>}, {pipeline_mode = #tpu.pipeline_mode<synchronous>, transform_indices = @transform_2, window_bounds = array<i64: 1, 128>}, {pipeline_mode = #tpu.pipeline_mode<synchronous>, transform_indices = @transform_3, window_bounds = array<i64: 128, 128>}, {pipeline_mode = #tpu.pipeline_mode<synchronous>, transform_indices = @transform_4, window_bounds = array<i64: 1, 128>}, {pipeline_mode = #tpu.pipeline_mode<synchronous>, transform_indices = @transform_5, window_bounds = array<i64: 128, 128>}, {pipeline_mode = #tpu.pipeline_mode<synchronous>, transform_indices = @transform_6, window_bounds = array<i64: 1, 128>}, {pipeline_mode = #tpu.pipeline_mode<synchronous>, transform_indices = @transform_7, window_bounds = array<i64: 128, 128>}, {pipeline_mode = #tpu.pipeline_mode<synchronous>, transform_indices = @transform_8, window_bounds = array<i64: 1, 128>}, {transform_indices = @transform_9, window_bounds = array<i64: 1, 8, 128>}]} {
    %c0 = arith.constant 0 : index
    %c0_0 = arith.constant 0 : index
    %c0_1 = arith.constant 0 : index
    %0 = vector.load %arg1[%c0, %c0_0, %c0_1] : memref<1x8x128xbf16, #tpu.memory_space<vmem>>, vector<1x8x128xbf16>
    %1 = vector.shape_cast %0 : vector<1x8x128xbf16> to vector<8x128xbf16>
    %c0_2 = arith.constant 0 : index
    %c0_3 = arith.constant 0 : index
    %2 = vector.load %arg2[%c0_2, %c0_3] : memref<128x128xbf16, #tpu.memory_space<vmem>>, vector<128x128xbf16>
    %cst = arith.constant dense<0.000000e+00> : vector<8x128xf32>
    %3 = tpu.matmul %1, %2, %cst {dimension_numbers = #tpu.dot_dimension_numbers<[1], [0], [0], [1], [0, 0, 1, 1], [], []>} : vector<8x128xbf16>, vector<128x128xbf16>, vector<8x128xf32> -> vector<8x128xf32>
    %c0_4 = arith.constant 0 : index
    %c0_5 = arith.constant 0 : index
    %4 = vector.load %arg3[%c0_4, %c0_5] : memref<1x128xf32, #tpu.memory_space<vmem>>, vector<1x128xf32>
    %5 = vector.broadcast %4 : vector<1x128xf32> to vector<8x128xf32>
    %6 = arith.addf %3, %5 : vector<8x128xf32>
    %cst_6 = arith.constant 1.250000e-01 : f32
    %7 = vector.broadcast %cst_6 : f32 to vector<8x128xf32>
    %8 = arith.mulf %6, %7 : vector<8x128xf32>
    %c0_7 = arith.constant 0 : index
    %c0_8 = arith.constant 0 : index
    %9 = vector.load %arg4[%c0_7, %c0_8] : memref<128x128xbf16, #tpu.memory_space<vmem>>, vector<128x128xbf16>
    %cst_9 = arith.constant dense<0.000000e+00> : vector<8x128xf32>
    %10 = tpu.matmul %1, %9, %cst_9 {dimension_numbers = #tpu.dot_dimension_numbers<[1], [0], [0], [1], [0, 0, 1, 1], [], []>} : vector<8x128xbf16>, vector<128x128xbf16>, vector<8x128xf32> -> vector<8x128xf32>
    %c0_10 = arith.constant 0 : index
    %c0_11 = arith.constant 0 : index
    %11 = vector.load %arg5[%c0_10, %c0_11] : memref<1x128xf32, #tpu.memory_space<vmem>>, vector<1x128xf32>
    %12 = vector.broadcast %11 : vector<1x128xf32> to vector<8x128xf32>
    %13 = arith.addf %10, %12 : vector<8x128xf32>
    %c0_12 = arith.constant 0 : index
    %c0_13 = arith.constant 0 : index
    %14 = vector.load %arg6[%c0_12, %c0_13] : memref<128x128xbf16, #tpu.memory_space<vmem>>, vector<128x128xbf16>
    %cst_14 = arith.constant dense<0.000000e+00> : vector<8x128xf32>
    %15 = tpu.matmul %1, %14, %cst_14 {dimension_numbers = #tpu.dot_dimension_numbers<[1], [0], [0], [1], [0, 0, 1, 1], [], []>} : vector<8x128xbf16>, vector<128x128xbf16>, vector<8x128xf32> -> vector<8x128xf32>
    %c0_15 = arith.constant 0 : index
    %c0_16 = arith.constant 0 : index
    %16 = vector.load %arg7[%c0_15, %c0_16] : memref<1x128xf32, #tpu.memory_space<vmem>>, vector<1x128xf32>
    %17 = vector.broadcast %16 : vector<1x128xf32> to vector<8x128xf32>
    %18 = arith.addf %15, %17 : vector<8x128xf32>
    %19 = arith.truncf %8 : vector<8x128xf32> to vector<8x128xbf16>
    %20 = arith.truncf %13 : vector<8x128xf32> to vector<8x128xbf16>
    %21 = arith.truncf %18 : vector<8x128xf32> to vector<8x128xbf16>
    %22 = vector.extract_strided_slice %19 {offsets = [0, 0], sizes = [8, 64], strides = [1, 1]} : vector<8x128xbf16> to vector<8x64xbf16>
    %23 = vector.extract_strided_slice %20 {offsets = [0, 0], sizes = [8, 64], strides = [1, 1]} : vector<8x128xbf16> to vector<8x64xbf16>
    %24 = vector.extract_strided_slice %21 {offsets = [0, 0], sizes = [8, 64], strides = [1, 1]} : vector<8x128xbf16> to vector<8x64xbf16>
    %cst_17 = arith.constant dense<0.000000e+00> : vector<8x8xf32>
    %25 = tpu.matmul %22, %23, %cst_17 {dimension_numbers = #tpu.dot_dimension_numbers<[1], [1], [0], [0], [0, 0, 1, 0], [], []>} : vector<8x64xbf16>, vector<8x64xbf16>, vector<8x8xf32> -> vector<8x8xf32>
    %cst_18 = arith.constant dense<0xFF800000> : vector<8xf32>
    %26 = vector.multi_reduction <maximumf>, %25, %cst_18 [1] : vector<8x8xf32> to vector<8xf32>
    %27 = vector.shape_cast %26 : vector<8xf32> to vector<8x1xf32>
    %28 = vector.broadcast %27 : vector<8x1xf32> to vector<8x8xf32>
    %29 = arith.subf %25, %28 : vector<8x8xf32>
    %30 = math.exp %29 : vector<8x8xf32>
    %cst_19 = arith.constant dense<0.000000e+00> : vector<8xf32>
    %31 = vector.multi_reduction <add>, %30, %cst_19 [1] : vector<8x8xf32> to vector<8xf32>
    %32 = vector.shape_cast %31 : vector<8xf32> to vector<8x1xf32>
    %33 = tpu.reciprocal %32 {approx = true} : vector<8x1xf32> -> vector<8x1xf32>
    %34 = vector.broadcast %33 : vector<8x1xf32> to vector<8x8xf32>
    %35 = arith.mulf %30, %34 : vector<8x8xf32>
    %36 = arith.truncf %35 : vector<8x8xf32> to vector<8x8xbf16>
    %cst_20 = arith.constant dense<0.000000e+00> : vector<8x64xf32>
    %37 = tpu.matmul %36, %24, %cst_20 {dimension_numbers = #tpu.dot_dimension_numbers<[1], [0], [0], [1], [0, 0, 1, 1], [], []>} : vector<8x8xbf16>, vector<8x64xbf16>, vector<8x64xf32> -> vector<8x64xf32>
    %38 = vector.extract_strided_slice %19 {offsets = [0, 64], sizes = [8, 64], strides = [1, 1]} : vector<8x128xbf16> to vector<8x64xbf16>
    %39 = vector.extract_strided_slice %20 {offsets = [0, 64], sizes = [8, 64], strides = [1, 1]} : vector<8x128xbf16> to vector<8x64xbf16>
    %40 = vector.extract_strided_slice %21 {offsets = [0, 64], sizes = [8, 64], strides = [1, 1]} : vector<8x128xbf16> to vector<8x64xbf16>
    %cst_21 = arith.constant dense<0.000000e+00> : vector<8x8xf32>
    %41 = tpu.matmul %38, %39, %cst_21 {dimension_numbers = #tpu.dot_dimension_numbers<[1], [1], [0], [0], [0, 0, 1, 0], [], []>} : vector<8x64xbf16>, vector<8x64xbf16>, vector<8x8xf32> -> vector<8x8xf32>
    %cst_22 = arith.constant dense<0xFF800000> : vector<8xf32>
    %42 = vector.multi_reduction <maximumf>, %41, %cst_22 [1] : vector<8x8xf32> to vector<8xf32>
    %43 = vector.shape_cast %42 : vector<8xf32> to vector<8x1xf32>
    %44 = vector.broadcast %43 : vector<8x1xf32> to vector<8x8xf32>
    %45 = arith.subf %41, %44 : vector<8x8xf32>
    %46 = math.exp %45 : vector<8x8xf32>
    %cst_23 = arith.constant dense<0.000000e+00> : vector<8xf32>
    %47 = vector.multi_reduction <add>, %46, %cst_23 [1] : vector<8x8xf32> to vector<8xf32>
    %48 = vector.shape_cast %47 : vector<8xf32> to vector<8x1xf32>
    %49 = tpu.reciprocal %48 {approx = true} : vector<8x1xf32> -> vector<8x1xf32>
    %50 = vector.broadcast %49 : vector<8x1xf32> to vector<8x8xf32>
    %51 = arith.mulf %46, %50 : vector<8x8xf32>
    %52 = arith.truncf %51 : vector<8x8xf32> to vector<8x8xbf16>
    %cst_24 = arith.constant dense<0.000000e+00> : vector<8x64xf32>
    %53 = tpu.matmul %52, %40, %cst_24 {dimension_numbers = #tpu.dot_dimension_numbers<[1], [0], [0], [1], [0, 0, 1, 1], [], []>} : vector<8x8xbf16>, vector<8x64xbf16>, vector<8x64xf32> -> vector<8x64xf32>
    %54 = tpu.concatenate %37, %53 in 1 : vector<8x64xf32>, vector<8x64xf32> -> vector<8x128xf32>
    %55 = arith.truncf %54 : vector<8x128xf32> to vector<8x128xbf16>
    %c0_25 = arith.constant 0 : index
    %c0_26 = arith.constant 0 : index
    %56 = vector.load %arg8[%c0_25, %c0_26] : memref<128x128xbf16, #tpu.memory_space<vmem>>, vector<128x128xbf16>
    %cst_27 = arith.constant dense<0.000000e+00> : vector<8x128xf32>
    %57 = tpu.matmul %55, %56, %cst_27 {dimension_numbers = #tpu.dot_dimension_numbers<[1], [0], [0], [1], [0, 0, 1, 1], [], []>} : vector<8x128xbf16>, vector<128x128xbf16>, vector<8x128xf32> -> vector<8x128xf32>
    %c0_28 = arith.constant 0 : index
    %c0_29 = arith.constant 0 : index
    %58 = vector.load %arg9[%c0_28, %c0_29] : memref<1x128xf32, #tpu.memory_space<vmem>>, vector<1x128xf32>
    %59 = vector.broadcast %58 : vector<1x128xf32> to vector<8x128xf32>
    %60 = arith.addf %57, %59 : vector<8x128xf32>
    %c0_30 = arith.constant 0 : index
    %c0_31 = arith.constant 0 : index
    %c0_32 = arith.constant 0 : index
    %61 = vector.load %arg10[%c0_30, %c0_31, %c0_32] : memref<1x8x128xf32, #tpu.memory_space<vmem>>, vector<1x8x128xf32>
    %62 = vector.shape_cast %61 : vector<1x8x128xf32> to vector<8x128xf32>
    %63 = vector.shape_cast %60 : vector<8x128xf32> to vector<1x8x128xf32>
    tpu.vector_store %arg10[%c0_30, %c0_31, %c0_32], %63 {strides = array<i32>} : memref<1x8x128xf32, #tpu.memory_space<vmem>>, vector<1x8x128xf32>,
    return
  }
  func.func @transform_0(%arg0: i32) -> (i32, i32, i32) {
    %c0_i32 = arith.constant 0 : i32
    %c0_i32_0 = arith.constant 0 : i32
    %c0_i32_1 = arith.constant 0 : i32
    return %arg0, %c0_i32, %c0_i32_0 : i32, i32, i32
  }
  func.func @transform_1(%arg0: i32) -> (i32, i32) {
    %c0_i32 = arith.constant 0 : i32
    %c0_i32_0 = arith.constant 0 : i32
    %c0_i32_1 = arith.constant 0 : i32
    return %c0_i32, %c0_i32_0 : i32, i32
  }
  func.func @transform_2(%arg0: i32) -> (i32, i32) {
    %c0_i32 = arith.constant 0 : i32
    %c0_i32_0 = arith.constant 0 : i32
    %c0_i32_1 = arith.constant 0 : i32
    return %c0_i32, %c0_i32_0 : i32, i32
  }
  func.func @transform_3(%arg0: i32) -> (i32, i32) {
    %c0_i32 = arith.constant 0 : i32
    %c0_i32_0 = arith.constant 0 : i32
    %c0_i32_1 = arith.constant 0 : i32
    return %c0_i32, %c0_i32_0 : i32, i32
  }
  func.func @transform_4(%arg0: i32) -> (i32, i32) {
    %c0_i32 = arith.constant 0 : i32
    %c0_i32_0 = arith.constant 0 : i32
    %c0_i32_1 = arith.constant 0 : i32
    return %c0_i32, %c0_i32_0 : i32, i32
  }
  func.func @transform_5(%arg0: i32) -> (i32, i32) {
    %c0_i32 = arith.constant 0 : i32
    %c0_i32_0 = arith.constant 0 : i32
    %c0_i32_1 = arith.constant 0 : i32
    return %c0_i32, %c0_i32_0 : i32, i32
  }
  func.func @transform_6(%arg0: i32) -> (i32, i32) {
    %c0_i32 = arith.constant 0 : i32
    %c0_i32_0 = arith.constant 0 : i32
    %c0_i32_1 = arith.constant 0 : i32
    return %c0_i32, %c0_i32_0 : i32, i32
  }
  func.func @transform_7(%arg0: i32) -> (i32, i32) {
    %c0_i32 = arith.constant 0 : i32
    %c0_i32_0 = arith.constant 0 : i32
    %c0_i32_1 = arith.constant 0 : i32
    return %c0_i32, %c0_i32_0 : i32, i32
  }
  func.func @transform_8(%arg0: i32) -> (i32, i32) {
    %c0_i32 = arith.constant 0 : i32
    %c0_i32_0 = arith.constant 0 : i32
    %c0_i32_1 = arith.constant 0 : i32
    return %c0_i32, %c0_i32_0 : i32, i32
  }
  func.func @transform_9(%arg0: i32) -> (i32, i32, i32) {
    %c0_i32 = arith.constant 0 : i32
    %c0_i32_0 = arith.constant 0 : i32
    %c0_i32_1 = arith.constant 0 : i32
    return %arg0, %c0_i32, %c0_i32_0 : i32, i32, i32
  }
}

</mosaic_0001>

<llo_original>
// kernel: tpu_custom_call.1
$region0: #{tpu_custom_call.1}
  #allocation0 [shape = 'u32[]', space=smem, size = 0x4, offset = 0x4, fixed_abs, tag = 'smem constant byte address 0x4 - core index']
  #allocation1 [shape = 'u32[72,128]{1,0:T(1,128)}', space=vmem, size = 0x9000, scoped, tag = 'internal scratch']
  %s0 = inlined_call_operand.hbm [shape: bf16[2,8,128], index: 0, kind: input, shape index: {}]
  %s1 = inlined_call_operand.hbm [shape: bf16[128,128], index: 1, kind: input, shape index: {}]
  %s2 = inlined_call_operand.vmem [shape: f32[1,128], index: 2, kind: input, shape index: {}]
  %s3 = inlined_call_operand.hbm [shape: bf16[128,128], index: 3, kind: input, shape index: {}]
  %s4 = inlined_call_operand.vmem [shape: f32[1,128], index: 4, kind: input, shape index: {}]
  %s5 = inlined_call_operand.hbm [shape: bf16[128,128], index: 5, kind: input, shape index: {}]
  %s6 = inlined_call_operand.vmem [shape: f32[1,128], index: 6, kind: input, shape index: {}]
  %s7 = inlined_call_operand.hbm [shape: bf16[128,128], index: 7, kind: input, shape index: {}]
  %s8 = inlined_call_operand.vmem [shape: f32[1,128], index: 8, kind: input, shape index: {}]
  %s9 = inlined_call_operand.hbm [shape: f32[2,8,128], index: 9, kind: output, shape index: {}]
  %s10 = sld [smem:[#allocation0]]
  $region89: #{tpu_custom_call.1} parent=0
    _
  %s12 = ssub.s32 1, %s10
  %s13 = scalar_select 0, %s12, %s10
  $region1: #{tpu_custom_call.1} parent=0
    #allocation2 [shape = 'u8[4096]{0}', space=vmem, size = 0x1000, scoped, tag = 'input window, operand 0']
    #allocation3 [shape = 's32[2]{0}', space=sflag, size = 0x8, scoped, tag = 'scoped memory for tpu_custom_call.1']
    #allocation4 [shape = 's32[2]{0}', space=sflag, size = 0x8, scoped, tag = 'scoped memory for tpu_custom_call.1']
    #allocation5 [shape = 'u8[32768]{0}', space=vmem, size = 0x8000, scoped, tag = 'input window, operand 1, single buffered']
    #allocation6 [shape = 's32[1]{0}', space=sflag, size = 0x4, scoped, tag = 'scoped memory for tpu_custom_call.1']
    #allocation7 [shape = 'u8[32768]{0}', space=vmem, size = 0x8000, scoped, tag = 'input window, operand 3, single buffered']
    #allocation8 [shape = 'u8[32768]{0}', space=vmem, size = 0x8000, scoped, tag = 'input window, operand 5, single buffered']
    #allocation9 [shape = 's32[1]{0}', space=sflag, size = 0x4, scoped, tag = 'scoped memory for tpu_custom_call.1']
    #allocation10 [shape = 'u8[32768]{0}', space=vmem, size = 0x8000, scoped, tag = 'input window, operand 7, single buffered']
    #allocation11 [shape = 'u8[8192]{0}', space=vmem, size = 0x2000, scoped, tag = 'output window, operand 0']
    %14 = vsyncpa [#allocation3], 0
    %s15 = scalar_lea.sflag [#allocation3], 1
    %16 = vsyncpa %s15, 0
    %17 = vsyncpa [#allocation6], 0
    %18 = vsyncpa [#allocation9], 0
    %19 = vsyncpa [#allocation4], 0
    %s20 = scalar_lea.sflag [#allocation4], 1
    %21 = vsyncpa %s20, 0
    loop: start=0, step=1, limit=4
    $region2: #{tpu_custom_call.1} parent=1 // loop_pre_header
      _
    $region3: #{tpu_custom_call.1} parent=1 // loop_header
      %s23 = sphi 0, %s27
      %p24 = scmp.ge.s32.totalorder %s23, 4
      %s33 = sphi 0, %s35
      %s36 = sphi 0, %s33
      %s37 = sphi 0, %s36
      %s53 = sphi 0, %s37
      %s57 = sphi 0, %s57
      %s59 = sphi 0, %s57
      %s60 = sphi 0, %s59
      %s74 = sphi 0, %s60
      %s78 = sphi 0, %s78
      %s80 = sphi 0, %s78
      %s81 = sphi 0, %s80
      %s95 = sphi 0, %s81
      %s99 = sphi 0, %s99
      %s101 = sphi 0, %s99
      %s102 = sphi 0, %s101
      %s116 = sphi 0, %s102
      %s120 = sphi 0, %s120
      %s122 = sphi 0, %s120
      %s123 = sphi 0, %s122
      %s137 = sphi 0, %s123
      %s141 = sphi 0, %s141
      %s143 = sphi 0, %s141
      %s144 = sphi 0, %s143
      %s158 = sphi 0, %s144
      %s162 = sphi 0, %s162
      %s164 = sphi 0, %s162
      %s165 = sphi 0, %s164
      %s179 = sphi 0, %s165
      %s183 = sphi 0, %s183
      %s185 = sphi 0, %s183
      %s186 = sphi 0, %s185
      %s200 = sphi 0, %s186
      %s204 = sphi 0, %s204
      %s206 = sphi 0, %s204
      %s207 = sphi 0, %s206
      %s221 = sphi 0, %s207
      %s227 = sphi 0, %s229
      %s230 = sphi 0, %s227
      %s231 = sphi 0, %s230
      %s247 = sphi 0, %s231
    $region4: #{tpu_custom_call.1} parent=1 // loop_header_branch
      %26 = sbr.rel (%p24) target = $region8
    $region5: #{tpu_custom_call.1} parent=1 // loop_body
      %s28 = ssub.s32 %s23, 1
      %s29 = ssub.s32 %s23, 2
      %s30 = sadd.s32 %s23, 1
      %s31 = ssub.s32 %s23, %s30
      %p32 = scmp.eq.s32.totalorder %s31, 0
      %s34 = sadd.s32 %s33, 1
      %s35 = scalar_select %p32, %s33, %s34
      %p38 = pneg %p32
      %p39 = scmp.eq.s32.totalorder %s23, 1
      %p40 = por %p38, %p39
      %p41 = scmp.ne.s32.totalorder %s33, %s36
      %p42 = scmp.eq.s32.totalorder %s23, 0
      %p43 = por %p41, %p42
      %p44 = scmp.ne.s32.totalorder %s33, %s36
      %p45 = scmp.eq.s32.totalorder %s28, 1
      %p46 = por %p44, %p45
      %p47 = scmp.ne.s32.totalorder %s36, %s37
      %p48 = scmp.eq.s32.totalorder %s28, 0
      %p49 = por %p47, %p48
      %p50 = scmp.ne.s32.totalorder %s36, %s37
      %p51 = scmp.eq.s32.totalorder %s29, 1
      %p52 = por %p50, %p51
      %p54 = scmp.ne.s32.totalorder %s37, %s53
      %p55 = scmp.eq.s32.totalorder %s29, 0
      %p56 = por %p54, %p55
      %s58 = sadd.s32 %s57, 1
      %p61 = scmp.eq.s32.totalorder %s23, 1
      %p62 = scmp.ne.s32.totalorder %s57, %s59
      %p63 = scmp.eq.s32.totalorder %s23, 0
      %p64 = por %p62, %p63
      %p65 = scmp.ne.s32.totalorder %s57, %s59
      %p66 = scmp.eq.s32.totalorder %s28, 1
      %p67 = por %p65, %p66
      %p68 = scmp.ne.s32.totalorder %s59, %s60
      %p69 = scmp.eq.s32.totalorder %s28, 0
      %p70 = por %p68, %p69
      %p71 = scmp.ne.s32.totalorder %s59, %s60
      %p72 = scmp.eq.s32.totalorder %s29, 1
      %p73 = por %p71, %p72
      %p75 = scmp.ne.s32.totalorder %s60, %s74
      %p76 = scmp.eq.s32.totalorder %s29, 0
      %p77 = por %p75, %p76
      %s79 = sadd.s32 %s78, 1
      %p82 = scmp.eq.s32.totalorder %s23, 1
      %p83 = scmp.ne.s32.totalorder %s78, %s80
      %p84 = scmp.eq.s32.totalorder %s23, 0
      %p85 = por %p83, %p84
      %p86 = scmp.ne.s32.totalorder %s78, %s80
      %p87 = scmp.eq.s32.totalorder %s28, 1
      %p88 = por %p86, %p87
      %p89 = scmp.ne.s32.totalorder %s80, %s81
      %p90 = scmp.eq.s32.totalorder %s28, 0
      %p91 = por %p89, %p90
      %p92 = scmp.ne.s32.totalorder %s80, %s81
      %p93 = scmp.eq.s32.totalorder %s29, 1
      %p94 = por %p92, %p93
      %p96 = scmp.ne.s32.totalorder %s81, %s95
      %p97 = scmp.eq.s32.totalorder %s29, 0
      %p98 = por %p96, %p97
      %s100 = sadd.s32 %s99, 1
      %p103 = scmp.eq.s32.totalorder %s23, 1
      %p104 = scmp.ne.s32.totalorder %s99, %s101
      %p105 = scmp.eq.s32.totalorder %s23, 0
      %p106 = por %p104, %p105
      %p107 = scmp.ne.s32.totalorder %s99, %s101
      %p108 = scmp.eq.s32.totalorder %s28, 1
      %p109 = por %p107, %p108
      %p110 = scmp.ne.s32.totalorder %s101, %s102
      %p111 = scmp.eq.s32.totalorder %s28, 0
      %p112 = por %p110, %p111
      %p113 = scmp.ne.s32.totalorder %s101, %s102
      %p114 = scmp.eq.s32.totalorder %s29, 1
      %p115 = por %p113, %p114
      %p117 = scmp.ne.s32.totalorder %s102, %s116
      %p118 = scmp.eq.s32.totalorder %s29, 0
      %p119 = por %p117, %p118
      %s121 = sadd.s32 %s120, 1
      %p124 = scmp.eq.s32.totalorder %s23, 1
      %p125 = scmp.ne.s32.totalorder %s120, %s122
      %p126 = scmp.eq.s32.totalorder %s23, 0
      %p127 = por %p125, %p126
      %p128 = scmp.ne.s32.totalorder %s120, %s122
      %p129 = scmp.eq.s32.totalorder %s28, 1
      %p130 = por %p128, %p129
      %p131 = scmp.ne.s32.totalorder %s122, %s123
      %p132 = scmp.eq.s32.totalorder %s28, 0
      %p133 = por %p131, %p132
      %p134 = scmp.ne.s32.totalorder %s122, %s123
      %p135 = scmp.eq.s32.totalorder %s29, 1
      %p136 = por %p134, %p135
      %p138 = scmp.ne.s32.totalorder %s123, %s137
      %p139 = scmp.eq.s32.totalorder %s29, 0
      %p140 = por %p138, %p139
      %s142 = sadd.s32 %s141, 1
      %p145 = scmp.eq.s32.totalorder %s23, 1
      %p146 = scmp.ne.s32.totalorder %s141, %s143
      %p147 = scmp.eq.s32.totalorder %s23, 0
      %p148 = por %p146, %p147
      %p149 = scmp.ne.s32.totalorder %s141, %s143
      %p150 = scmp.eq.s32.totalorder %s28, 1
      %p151 = por %p149, %p150
      %p152 = scmp.ne.s32.totalorder %s143, %s144
      %p153 = scmp.eq.s32.totalorder %s28, 0
      %p154 = por %p152, %p153
      %p155 = scmp.ne.s32.totalorder %s143, %s144
      %p156 = scmp.eq.s32.totalorder %s29, 1
      %p157 = por %p155, %p156
      %p159 = scmp.ne.s32.totalorder %s144, %s158
      %p160 = scmp.eq.s32.totalorder %s29, 0
      %p161 = por %p159, %p160
      %s163 = sadd.s32 %s162, 1
      %p166 = scmp.eq.s32.totalorder %s23, 1
      %p167 = scmp.ne.s32.totalorder %s162, %s164
      %p168 = scmp.eq.s32.totalorder %s23, 0
      %p169 = por %p167, %p168
      %p170 = scmp.ne.s32.totalorder %s162, %s164
      %p171 = scmp.eq.s32.totalorder %s28, 1
      %p172 = por %p170, %p171
      %p173 = scmp.ne.s32.totalorder %s164, %s165
      %p174 = scmp.eq.s32.totalorder %s28, 0
      %p175 = por %p173, %p174
      %p176 = scmp.ne.s32.totalorder %s164, %s165
      %p177 = scmp.eq.s32.totalorder %s29, 1
      %p178 = por %p176, %p177
      %p180 = scmp.ne.s32.totalorder %s165, %s179
      %p181 = scmp.eq.s32.totalorder %s29, 0
      %p182 = por %p180, %p181
      %s184 = sadd.s32 %s183, 1
      %p187 = scmp.eq.s32.totalorder %s23, 1
      %p188 = scmp.ne.s32.totalorder %s183, %s185
      %p189 = scmp.eq.s32.totalorder %s23, 0
      %p190 = por %p188, %p189
      %p191 = scmp.ne.s32.totalorder %s183, %s185
      %p192 = scmp.eq.s32.totalorder %s28, 1
      %p193 = por %p191, %p192
      %p194 = scmp.ne.s32.totalorder %s185, %s186
      %p195 = scmp.eq.s32.totalorder %s28, 0
      %p196 = por %p194, %p195
      %p197 = scmp.ne.s32.totalorder %s185, %s186
      %p198 = scmp.eq.s32.totalorder %s29, 1
      %p199 = por %p197, %p198
      %p201 = scmp.ne.s32.totalorder %s186, %s200
      %p202 = scmp.eq.s32.totalorder %s29, 0
      %p203 = por %p201, %p202
      %s205 = sadd.s32 %s204, 1
      %p208 = scmp.eq.s32.totalorder %s23, 1
      %p209 = scmp.ne.s32.totalorder %s204, %s206
      %p210 = scmp.eq.s32.totalorder %s23, 0
      %p211 = por %p209, %p210
      %p212 = scmp.ne.s32.totalorder %s204, %s206
      %p213 = scmp.eq.s32.totalorder %s28, 1
      %p214 = por %p212, %p213
      %p215 = scmp.ne.s32.totalorder %s206, %s207
      %p216 = scmp.eq.s32.totalorder %s28, 0
      %p217 = por %p215, %p216
      %p218 = scmp.ne.s32.totalorder %s206, %s207
      %p219 = scmp.eq.s32.totalorder %s29, 1
      %p220 = por %p218, %p219
      %p222 = scmp.ne.s32.totalorder %s207, %s221
      %p223 = scmp.eq.s32.totalorder %s29, 0
      %p224 = por %p222, %p223
      %s225 = ssub.s32 %s23, %s30
      %p226 = scmp.eq.s32.totalorder %s225, 0
      %s228 = sadd.s32 %s227, 1
      %s229 = scalar_select %p226, %s227, %s228
      %p232 = pneg %p226
      %p233 = scmp.eq.s32.totalorder %s23, 1
      %p234 = por %p232, %p233
      %p235 = scmp.ne.s32.totalorder %s227, %s230
      %p236 = scmp.eq.s32.totalorder %s23, 0
      %p237 = por %p235, %p236
      %p238 = scmp.ne.s32.totalorder %s227, %s230
      %p239 = scmp.eq.s32.totalorder %s28, 1
      %p240 = por %p238, %p239
      %p241 = scmp.ne.s32.totalorder %s230, %s231
      %p242 = scmp.eq.s32.totalorder %s28, 0
      %p243 = por %p241, %p242
      %p244 = scmp.ne.s32.totalorder %s230, %s231
      %p245 = scmp.eq.s32.totalorder %s29, 1
      %p246 = por %p244, %p245
      %p248 = scmp.ne.s32.totalorder %s231, %s247
      %p249 = scmp.eq.s32.totalorder %s29, 0
      %p250 = por %p248, %p249
      %p251 = scmp.le.s32.totalorder 1, %s23
      %p252 = scmp.lt.s32.totalorder %s23, 3
      %p253 = pnand %p251, %p252
      %p254 = pneg %p253
      // Predicated region
      $region9: #{tpu_custom_call.1} parent=5 // pred_check
        _
      $region10: #{tpu_custom_call.1} parent=5 // pred_check_branch
        %256 = sbr.rel (%p253) target = $region12
      $region11: #{tpu_custom_call.1} parent=5 // pred_region
        %s257 = ssub.s32 %s23, 1
        // Predicated region
        $region13: #{tpu_custom_call.1} parent=11 // pred_check
          %p258 = pneg %p70
        $region14: #{tpu_custom_call.1} parent=11 // pred_check_branch
          %260 = sbr.rel (%p258) target = $region16
        $region15: #{tpu_custom_call.1} parent=11 // pred_region
          %262 = vsyncadd [#allocation6], 0
          %s263 = sshll.u32 %s1, 4
          %s264 = int_to_ptr.hbm [resolvable:$true] %s263
          %s265 = sshll.u32 [#allocation5], 4
          %s266 = int_to_ptr.vmem [resolvable:$true] %s265
          %271 = dma.hbm_to_vmem [thread:$0]  %s264, 1024, %s266, [#allocation6], 64, 64, 4
        $region16: #{tpu_custom_call.1} parent=11 // pred_fallthru
          _
        // Predicated region
        $region17: #{tpu_custom_call.1} parent=11 // pred_check
          %p272 = pneg %p91
        $region18: #{tpu_custom_call.1} parent=11 // pred_check_branch
          %274 = sbr.rel (%p272) target = $region20
        $region19: #{tpu_custom_call.1} parent=11 // pred_region
          _
        $region20: #{tpu_custom_call.1} parent=11 // pred_fallthru
          _
        // Predicated region
        $region21: #{tpu_custom_call.1} parent=11 // pred_check
          %p275 = pneg %p112
        $region22: #{tpu_custom_call.1} parent=11 // pred_check_branch
          %277 = sbr.rel (%p275) target = $region24
        $region23: #{tpu_custom_call.1} parent=11 // pred_region
          %279 = vsyncadd [#allocation6], 0
          %s280 = sshll.u32 %s3, 4
          %s281 = int_to_ptr.hbm [resolvable:$true] %s280
          %s282 = sshll.u32 [#allocation7], 4
          %s283 = int_to_ptr.vmem [resolvable:$true] %s282
          %288 = dma.hbm_to_vmem [thread:$0]  %s281, 1024, %s283, [#allocation6], 64, 64, 4
        $region24: #{tpu_custom_call.1} parent=11 // pred_fallthru
          _
        // Predicated region
        $region25: #{tpu_custom_call.1} parent=11 // pred_check
          %p289 = pneg %p133
        $region26: #{tpu_custom_call.1} parent=11 // pred_check_branch
          %291 = sbr.rel (%p289) target = $region28
        $region27: #{tpu_custom_call.1} parent=11 // pred_region
          _
        $region28: #{tpu_custom_call.1} parent=11 // pred_fallthru
          _
        // Predicated region
        $region29: #{tpu_custom_call.1} parent=11 // pred_check
          %p292 = pneg %p154
        $region30: #{tpu_custom_call.1} parent=11 // pred_check_branch
          %294 = sbr.rel (%p292) target = $region32
        $region31: #{tpu_custom_call.1} parent=11 // pred_region
          %296 = vsyncadd [#allocation9], 0
          %s297 = sshll.u32 %s5, 4
          %s298 = int_to_ptr.hbm [resolvable:$true] %s297
          %s299 = sshll.u32 [#allocation8], 4
          %s300 = int_to_ptr.vmem [resolvable:$true] %s299
          %305 = dma.hbm_to_vmem [thread:$0]  %s298, 1024, %s300, [#allocation9], 64, 64, 4
        $region32: #{tpu_custom_call.1} parent=11 // pred_fallthru
          _
        // Predicated region
        $region33: #{tpu_custom_call.1} parent=11 // pred_check
          %p306 = pneg %p175
        $region34: #{tpu_custom_call.1} parent=11 // pred_check_branch
          %308 = sbr.rel (%p306) target = $region36
        $region35: #{tpu_custom_call.1} parent=11 // pred_region
          _
        $region36: #{tpu_custom_call.1} parent=11 // pred_fallthru
          _
        // Predicated region
        $region37: #{tpu_custom_call.1} parent=11 // pred_check
          %p309 = pneg %p196
        $region38: #{tpu_custom_call.1} parent=11 // pred_check_branch
          %311 = sbr.rel (%p309) target = $region40
        $region39: #{tpu_custom_call.1} parent=11 // pred_region
          %313 = vsyncadd [#allocation9], 0
          %s314 = sshll.u32 %s7, 4
          %s315 = int_to_ptr.hbm [resolvable:$true] %s314
          %s316 = sshll.u32 [#allocation10], 4
          %s317 = int_to_ptr.vmem [resolvable:$true] %s316
          %322 = dma.hbm_to_vmem [thread:$0]  %s315, 1024, %s317, [#allocation9], 64, 64, 4
        $region40: #{tpu_custom_call.1} parent=11 // pred_fallthru
          _
        // Predicated region
        $region41: #{tpu_custom_call.1} parent=11 // pred_check
          %p323 = pneg %p217
        $region42: #{tpu_custom_call.1} parent=11 // pred_check_branch
          %325 = sbr.rel (%p323) target = $region44
        $region43: #{tpu_custom_call.1} parent=11 // pred_region
          _
        $region44: #{tpu_custom_call.1} parent=11 // pred_fallthru
          _
      $region12: #{tpu_custom_call.1} parent=5 // pred_fallthru
        _
      %p326 = scmp.lt.s32.totalorder %s23, 2
      // Predicated region
      $region45: #{tpu_custom_call.1} parent=5 // pred_check
        %p327 = pneg %p326
      $region46: #{tpu_custom_call.1} parent=5 // pred_check_branch
        %329 = sbr.rel (%p327) target = $region48
      $region47: #{tpu_custom_call.1} parent=5 // pred_region
        // Predicated region
        $region49: #{tpu_custom_call.1} parent=47 // pred_check
          %p330 = pneg %p43
        $region50: #{tpu_custom_call.1} parent=47 // pred_check_branch
          %332 = sbr.rel (%p330) target = $region52
        $region51: #{tpu_custom_call.1} parent=47 // pred_region
          %s333 = sand.u32 %s33, 1
          %s334 = scalar_lea.sflag [#allocation3], %s333
          %s335 = sand.u32 %s33, 1
          %s336 = smul.addr %s335, 4
          %s337 = scalar_lea.vmem [#allocation2], %s336
          %339 = vsyncadd %s334, 0
          %s340 = smul.addr %s23, 4
          %s341 = scalar_lea.hbm %s0, %s340
          %s343 = sshll.u32 %s341, 4
          %s344 = int_to_ptr.hbm [resolvable:$true] %s343
          %s345 = sshll.u32 %s337, 4
          %s346 = int_to_ptr.vmem [resolvable:$true] %s345
          %348 = dma.hbm_to_vmem [thread:$0]  %s344, 64, %s346, %s334
        $region52: #{tpu_custom_call.1} parent=47 // pred_fallthru
          _
      $region48: #{tpu_custom_call.1} parent=5 // pred_fallthru
        _
      %p349 = scmp.le.s32.totalorder 1, %s23
      %p350 = scmp.lt.s32.totalorder %s23, 3
      %p351 = pnand %p349, %p350
      %p352 = pneg %p351
      // Predicated region
      $region53: #{tpu_custom_call.1} parent=5 // pred_check
        _
      $region54: #{tpu_custom_call.1} parent=5 // pred_check_branch
        %354 = sbr.rel (%p351) target = $region56
      $region55: #{tpu_custom_call.1} parent=5 // pred_region
        %s355 = ssub.s32 %s23, 1
        %s356 = sand.u32 %s36, 1
        %s357 = scalar_lea.sflag [#allocation3], %s356
        %s358 = sand.u32 %s36, 1
        %s359 = smul.addr %s358, 4
        %s360 = scalar_lea.vmem [#allocation2], %s359
        // Predicated region
        $region57: #{tpu_custom_call.1} parent=55 // pred_check
          %p361 = pneg %p49
        $region58: #{tpu_custom_call.1} parent=55 // pred_check_branch
          %363 = sbr.rel (%p361) target = $region60
        $region59: #{tpu_custom_call.1} parent=55 // pred_region
          %365 = dma.done %s357, 64
        $region60: #{tpu_custom_call.1} parent=55 // pred_fallthru
          _
        // Predicated region
        $region61: #{tpu_custom_call.1} parent=55 // pred_check
          %p366 = pneg %p70
        $region62: #{tpu_custom_call.1} parent=55 // pred_check_branch
          %368 = sbr.rel (%p366) target = $region64
        $region63: #{tpu_custom_call.1} parent=55 // pred_region
          %370 = dma.done [#allocation6], 1024
        $region64: #{tpu_custom_call.1} parent=55 // pred_fallthru
          _
        // Predicated region
        $region65: #{tpu_custom_call.1} parent=55 // pred_check
          %p371 = pneg %p112
        $region66: #{tpu_custom_call.1} parent=55 // pred_check_branch
          %373 = sbr.rel (%p371) target = $region68
        $region67: #{tpu_custom_call.1} parent=55 // pred_region
          %375 = dma.done [#allocation6], 1024
        $region68: #{tpu_custom_call.1} parent=55 // pred_fallthru
          _
        // Predicated region
        $region69: #{tpu_custom_call.1} parent=55 // pred_check
          %p376 = pneg %p154
        $region70: #{tpu_custom_call.1} parent=55 // pred_check_branch
          %378 = sbr.rel (%p376) target = $region72
        $region71: #{tpu_custom_call.1} parent=55 // pred_region
          %380 = dma.done [#allocation9], 1024
        $region72: #{tpu_custom_call.1} parent=55 // pred_fallthru
          _
        // Predicated region
        $region73: #{tpu_custom_call.1} parent=55 // pred_check
          %p381 = pneg %p196
        $region74: #{tpu_custom_call.1} parent=55 // pred_check_branch
          %383 = sbr.rel (%p381) target = $region76
        $region75: #{tpu_custom_call.1} parent=55 // pred_region
          %385 = dma.done [#allocation9], 1024
        $region76: #{tpu_custom_call.1} parent=55 // pred_fallthru
          _
        %s386 = sand.u32 %s36, 1
        %s387 = scalar_lea.sflag [#allocation3], %s386
        %s388 = sand.u32 %s36, 1
        %s389 = smul.addr %s388, 4
        %s390 = scalar_lea.vmem [#allocation2], %s389
        %p391 = pneg %p49
        %p392 = pneg %p46
        %p393 = pneg %p70
        %p394 = pneg %p67
        %p395 = pneg %p91
        %p396 = pneg %p88
        %p397 = pneg %p112
        %p398 = pneg %p109
        %p399 = pneg %p133
        %p400 = pneg %p130
        %p401 = pneg %p154
        %p402 = pneg %p151
        %p403 = pneg %p175
        %p404 = pneg %p172
        %p405 = pneg %p196
        %p406 = pneg %p193
        %p407 = pneg %p217
        %p408 = pneg %p214
        %p409 = pneg %p243
        %p410 = pneg %p240
        %s411 = sand.u32 %s230, 1
        %s412 = scalar_lea.sflag [#allocation4], %s411
        %s413 = sand.u32 %s230, 1
        %s414 = smul.addr %s413, 8
        %s415 = scalar_lea.vmem [#allocation11], %s414
        %v417 = vld [vmem:[%s360] sm:$0xf]
        %v418 = vld [vmem:[#allocation5] sm:$0xf]
        %v419 = vld [vmem:[#allocation5 + $0x4] sm:$0xf]
        %v420 = vld [vmem:[#allocation5 + $0x8] sm:$0xf]
        %v421 = vld [vmem:[#allocation5 + $0xc] sm:$0xf]
        %v422 = vld [vmem:[#allocation5 + $0x10] sm:$0xf]
        %v423 = vld [vmem:[#allocation5 + $0x14] sm:$0xf]
        %v424 = vld [vmem:[#allocation5 + $0x18] sm:$0xf]
        %v425 = vld [vmem:[#allocation5 + $0x1c] sm:$0xf]
        %v426 = vld [vmem:[#allocation5 + $0x20] sm:$0xf]
        %v427 = vld [vmem:[#allocation5 + $0x24] sm:$0xf]
        %v428 = vld [vmem:[#allocation5 + $0x28] sm:$0xf]
        %v429 = vld [vmem:[#allocation5 + $0x2c] sm:$0xf]
        %v430 = vld [vmem:[#allocation5 + $0x30] sm:$0xf]
        %v431 = vld [vmem:[#allocation5 + $0x34] sm:$0xf]
        %v432 = vld [vmem:[#allocation5 + $0x38] sm:$0xf]
        %v433 = vld [vmem:[#allocation5 + $0x3c] sm:$0xf]
        %v434 = vld [vmem:[%s2] sm:$0x1]
        %v436 = vperm.slane %v434, 0
        %v454 = vunpack.c.l.b16 %v418
        %v455 = vunpack.c.l.b16 %v419
        %v456 = vunpack.c.l.b16 %v420
        %v457 = vunpack.c.l.b16 %v421
        %v458 = vunpack.c.l.b16 %v422
        %v459 = vunpack.c.l.b16 %v423
        %v460 = vunpack.c.l.b16 %v424
        %v461 = vunpack.c.l.b16 %v425
        %v462 = vunpack.c.l.b16 %v426
        %v463 = vunpack.c.l.b16 %v427
        %v464 = vunpack.c.l.b16 %v428
        %v465 = vunpack.c.l.b16 %v429
        %v466 = vunpack.c.l.b16 %v430
        %v467 = vunpack.c.l.b16 %v431
        %v468 = vunpack.c.l.b16 %v432
        %v469 = vunpack.c.l.b16 %v433
        %v470 = vpack.c.b16 %v455, %v454
        %v471 = vpack.c.b16 %v457, %v456
        %v472 = vpack.c.b16 %v459, %v458
        %v473 = vpack.c.b16 %v461, %v460
        %v474 = vpack.c.b16 %v463, %v462
        %v475 = vpack.c.b16 %v465, %v464
        %v476 = vpack.c.b16 %v467, %v466
        %v477 = vpack.c.b16 %v469, %v468
        %486 = vmatpush.bf16.msra.mxu0 %v477
        %487 = vmatpush.bf16.msra.mxu0 %v476
        %488 = vmatpush.bf16.msra.mxu0 %v475
        %489 = vmatpush.bf16.msra.mxu0 %v474
        %490 = vmatpush.bf16.msra.mxu0 %v473
        %491 = vmatpush.bf16.msra.mxu0 %v472
        %492 = vmatpush.bf16.msra.mxu0 %v471
        %493 = vmatpush.bf16.msra.mxu0 %v470
        %494 = vmatmul.bf16.gmra.mxu0 %v417
        %v495 = vpop.f32.mrf.mxu0
        %v496 = vadd.f32 %v436, %v495
        %v497 = vpop.f32.mrf.mxu0
        %498 = vdwg.mxu0
        %v499 = vmul.f32 %v496, 0.125
        %v500 = vld [vmem:[#allocation7] sm:$0xf]
        %v501 = vld [vmem:[#allocation7 + $0x4] sm:$0xf]
        %v502 = vld [vmem:[#allocation7 + $0x8] sm:$0xf]
        %v503 = vld [vmem:[#allocation7 + $0xc] sm:$0xf]
        %v504 = vld [vmem:[#allocation7 + $0x10] sm:$0xf]
        %v505 = vld [vmem:[#allocation7 + $0x14] sm:$0xf]
        %v506 = vld [vmem:[#allocation7 + $0x18] sm:$0xf]
        %v507 = vld [vmem:[#allocation7 + $0x1c] sm:$0xf]
        %v508 = vld [vmem:[#allocation7 + $0x20] sm:$0xf]
        %v509 = vld [vmem:[#allocation7 + $0x24] sm:$0xf]
        %v510 = vld [vmem:[#allocation7 + $0x28] sm:$0xf]
        %v511 = vld [vmem:[#allocation7 + $0x2c] sm:$0xf]
        %v512 = vld [vmem:[#allocation7 + $0x30] sm:$0xf]
        %v513 = vld [vmem:[#allocation7 + $0x34] sm:$0xf]
        %v514 = vld [vmem:[#allocation7 + $0x38] sm:$0xf]
        %v515 = vld [vmem:[#allocation7 + $0x3c] sm:$0xf]
        %v516 = vld [vmem:[%s4] sm:$0x1]
        %v518 = vperm.slane %v516, 0
        %v536 = vunpack.c.l.b16 %v500
        %v537 = vunpack.c.l.b16 %v501
        %v538 = vunpack.c.l.b16 %v502
        %v539 = vunpack.c.l.b16 %v503
        %v540 = vunpack.c.l.b16 %v504
        %v541 = vunpack.c.l.b16 %v505
        %v542 = vunpack.c.l.b16 %v506
        %v543 = vunpack.c.l.b16 %v507
        %v544 = vunpack.c.l.b16 %v508
        %v545 = vunpack.c.l.b16 %v509
        %v546 = vunpack.c.l.b16 %v510
        %v547 = vunpack.c.l.b16 %v511
        %v548 = vunpack.c.l.b16 %v512
        %v549 = vunpack.c.l.b16 %v513
        %v550 = vunpack.c.l.b16 %v514
        %v551 = vunpack.c.l.b16 %v515
        %v552 = vpack.c.b16 %v537, %v536
        %v553 = vpack.c.b16 %v539, %v538
        %v554 = vpack.c.b16 %v541, %v540
        %v555 = vpack.c.b16 %v543, %v542
        %v556 = vpack.c.b16 %v545, %v544
        %v557 = vpack.c.b16 %v547, %v546
        %v558 = vpack.c.b16 %v549, %v548
        %v559 = vpack.c.b16 %v551, %v550
        %568 = vmatpush.bf16.msra.mxu0 %v559
        %569 = vmatpush.bf16.msra.mxu0 %v558
        %570 = vmatpush.bf16.msra.mxu0 %v557
        %571 = vmatpush.bf16.msra.mxu0 %v556
        %572 = vmatpush.bf16.msra.mxu0 %v555
        %573 = vmatpush.bf16.msra.mxu0 %v554
        %574 = vmatpush.bf16.msra.mxu0 %v553
        %575 = vmatpush.bf16.msra.mxu0 %v552
        %576 = vmatmul.bf16.gmra.mxu0 %v417
        %v577 = vpop.f32.mrf.mxu0
        %v578 = vadd.f32 %v518, %v577
        %v579 = vpop.f32.mrf.mxu0
        %580 = vdwg.mxu0
        %v581 = vld [vmem:[#allocation8] sm:$0xf]
        %v582 = vld [vmem:[#allocation8 + $0x4] sm:$0xf]
        %v583 = vld [vmem:[#allocation8 + $0x8] sm:$0xf]
        %v584 = vld [vmem:[#allocation8 + $0xc] sm:$0xf]
        %v585 = vld [vmem:[#allocation8 + $0x10] sm:$0xf]
        %v586 = vld [vmem:[#allocation8 + $0x14] sm:$0xf]
        %v587 = vld [vmem:[#allocation8 + $0x18] sm:$0xf]
        %v588 = vld [vmem:[#allocation8 + $0x1c] sm:$0xf]
        %v589 = vld [vmem:[#allocation8 + $0x20] sm:$0xf]
        %v590 = vld [vmem:[#allocation8 + $0x24] sm:$0xf]
        %v591 = vld [vmem:[#allocation8 + $0x28] sm:$0xf]
        %v592 = vld [vmem:[#allocation8 + $0x2c] sm:$0xf]
        %v593 = vld [vmem:[#allocation8 + $0x30] sm:$0xf]
        %v594 = vld [vmem:[#allocation8 + $0x34] sm:$0xf]
        %v595 = vld [vmem:[#allocation8 + $0x38] sm:$0xf]
        %v596 = vld [vmem:[#allocation8 + $0x3c] sm:$0xf]
        %v597 = vld [vmem:[%s6] sm:$0x1]
        %v599 = vperm.slane %v597, 0
        %v617 = vunpack.c.l.b16 %v581
        %v618 = vunpack.c.l.b16 %v582
        %v619 = vunpack.c.l.b16 %v583
        %v620 = vunpack.c.l.b16 %v584
        %v621 = vunpack.c.l.b16 %v585
        %v622 = vunpack.c.l.b16 %v586
        %v623 = vunpack.c.l.b16 %v587
        %v624 = vunpack.c.l.b16 %v588
        %v625 = vunpack.c.l.b16 %v589
        %v626 = vunpack.c.l.b16 %v590
        %v627 = vunpack.c.l.b16 %v591
        %v628 = vunpack.c.l.b16 %v592
        %v629 = vunpack.c.l.b16 %v593
        %v630 = vunpack.c.l.b16 %v594
        %v631 = vunpack.c.l.b16 %v595
        %v632 = vunpack.c.l.b16 %v596
        %v633 = vpack.c.b16 %v618, %v617
        %v634 = vpack.c.b16 %v620, %v619
        %v635 = vpack.c.b16 %v622, %v621
        %v636 = vpack.c.b16 %v624, %v623
        %v637 = vpack.c.b16 %v626, %v625
        %v638 = vpack.c.b16 %v628, %v627
        %v639 = vpack.c.b16 %v630, %v629
        %v640 = vpack.c.b16 %v632, %v631
        %649 = vmatpush.bf16.msra.mxu0 %v640
        %650 = vmatpush.bf16.msra.mxu0 %v639
        %651 = vmatpush.bf16.msra.mxu0 %v638
        %652 = vmatpush.bf16.msra.mxu0 %v637
        %653 = vmatpush.bf16.msra.mxu0 %v636
        %654 = vmatpush.bf16.msra.mxu0 %v635
        %655 = vmatpush.bf16.msra.mxu0 %v634
        %656 = vmatpush.bf16.msra.mxu0 %v633
        %657 = vmatmul.bf16.gmra.mxu0 %v417
        %v658 = vpop.f32.mrf.mxu0
        %v659 = vadd.f32 %v599, %v658
        %v660 = vpop.f32.mrf.mxu0
        %661 = vdwg.mxu0
        %v662 = vpack.c.bf16 %v499, %v499
        %v663 = vpack.c.bf16 %v578, %v578
        %v664 = vpack.c.bf16 %v659, %v659
        %vm665 = vcmask 523264
        %v667 = vsel %vm665, %v662, 0
        %v670 = vsel %vm665, %v663, 0
        %672 = vmatpush.bf16.xpose.msra.mxu0 0
        %673 = vmatpush.bf16.xpose.msra.mxu0 0
        %674 = vmatpush.bf16.xpose.msra.mxu0 0
        %675 = vmatpush.bf16.xpose.msra.mxu0 0
        %676 = vmatpush.bf16.xpose.msra.mxu0 0
        %677 = vmatpush.bf16.xpose.msra.mxu0 0
        %678 = vmatpush.bf16.xpose.msra.mxu0 0
        %679 = vmatpush.bf16.xpose.msra.mxu0 %v670
        %680 = vmatmul.bf16.gmra.mxu0 %v667
        %v681 = vpop.f32.mrf.mxu0
        %v682 = vadd.f32 0.0, %v681
        %v683 = vpop.f32.mrf.mxu0
        %684 = vdwg.mxu0
        %vm685 = vcmask 64512
        %v686 = vsel %vm685, %v682, -inf
        %687 = vmax.xlane.f32.xlu0 %v686
        %v688 = vpop.xlane.xlu0 %687
        %v689 = vsub.f32 %v682, %v688
        %v690 = vmul.f32 %v689, 1.442695
        %v691 = vpow.pop %v690
        %v692 = vsel %vm685, %v691, 0.0
        %693 = vadd.xlane.f32.xlu0 %v692
        %v694 = vpop.xlane.xlu0 %693
        %v695 = vrcp.pop %v694
        %v696 = vmul.f32 %v691, %v695
        %v697 = vpack.c.bf16 %v696, %v696
        %v699 = vsel %vm685, %v697, 0
        %vm701 = vcmask 1043456
        %v703 = vsel %vm701, %v664, 0
        %705 = vmatpush.bf16.msra.mxu0 0
        %706 = vmatpush.bf16.msra.mxu0 0
        %707 = vmatpush.bf16.msra.mxu0 0
        %708 = vmatpush.bf16.msra.mxu0 0
        %709 = vmatpush.bf16.msra.mxu0 0
        %710 = vmatpush.bf16.msra.mxu0 0
        %711 = vmatpush.bf16.msra.mxu0 0
        %712 = vmatpush.bf16.msra.mxu0 %v703
        %713 = vmatmul.bf16.gmra.mxu0 %v699
        %v714 = vpop.f32.mrf.mxu0
        %v715 = vadd.f32 0.0, %v714
        %v716 = vpop.f32.mrf.mxu0
        %717 = vdwg.mxu0
        %v719 = vunpack.c.l.b16 %v662
        %v720 = vpack.c.b16 %v719, %v719
        %721 = vrot.lane.b32.xlu0 %v720, 64
        %v722 = vpop.permute.xlu0 %721
        %v724 = vunpack.c.l.b16 %v663
        %v725 = vpack.c.b16 %v724, %v724
        %726 = vrot.lane.b32.xlu0 %v725, 64
        %v727 = vpop.permute.xlu0 %726
        %v729 = vsel %vm665, %v722, 0
        %v732 = vsel %vm665, %v727, 0
        %734 = vmatpush.bf16.xpose.msra.mxu0 0
        %735 = vmatpush.bf16.xpose.msra.mxu0 0
        %736 = vmatpush.bf16.xpose.msra.mxu0 0
        %737 = vmatpush.bf16.xpose.msra.mxu0 0
        %738 = vmatpush.bf16.xpose.msra.mxu0 0
        %739 = vmatpush.bf16.xpose.msra.mxu0 0
        %740 = vmatpush.bf16.xpose.msra.mxu0 0
        %741 = vmatpush.bf16.xpose.msra.mxu0 %v732
        %742 = vmatmul.bf16.gmra.mxu0 %v729
        %v743 = vpop.f32.mrf.mxu0
        %v744 = vadd.f32 0.0, %v743
        %v745 = vpop.f32.mrf.mxu0
        %746 = vdwg.mxu0
        %v747 = vsel %vm685, %v744, -inf
        %748 = vmax.xlane.f32.xlu0 %v747
        %v749 = vpop.xlane.xlu0 %748
        %v750 = vsub.f32 %v744, %v749
        %v751 = vmul.f32 %v750, 1.442695
        %v752 = vpow.pop %v751
        %v753 = vsel %vm685, %v752, 0.0
        %754 = vadd.xlane.f32.xlu0 %v753
        %v755 = vpop.xlane.xlu0 %754
        %v756 = vrcp.pop %v755
        %v757 = vmul.f32 %v752, %v756
        %v758 = vpack.c.bf16 %v757, %v757
        %v760 = vunpack.c.l.b16 %v664
        %v761 = vpack.c.b16 %v760, %v760
        %762 = vrot.lane.b32.xlu0 %v761, 64
        %v763 = vpop.permute.xlu0 %762
        %v765 = vsel %vm685, %v758, 0
        %v768 = vsel %vm701, %v763, 0
        %770 = vmatpush.bf16.msra.mxu0 0
        %771 = vmatpush.bf16.msra.mxu0 0
        %772 = vmatpush.bf16.msra.mxu0 0
        %773 = vmatpush.bf16.msra.mxu0 0
        %774 = vmatpush.bf16.msra.mxu0 0
        %775 = vmatpush.bf16.msra.mxu0 0
        %776 = vmatpush.bf16.msra.mxu0 0
        %777 = vmatpush.bf16.msra.mxu0 %v768
        %778 = vmatmul.bf16.gmra.mxu0 %v765
        %v779 = vpop.f32.mrf.mxu0
        %v780 = vadd.f32 0.0, %v779
        %v781 = vpop.f32.mrf.mxu0
        %782 = vdwg.mxu0
        %784 = vrot.lane.b32.xlu0 %v780, 64
        %v785 = vpop.permute.xlu0 %784
        %v787 = vsel %vm665, %v715, %v785
        %v788 = vpack.c.bf16 %v787, %v787
        %v789 = vld [vmem:[#allocation10] sm:$0xf]
        %v790 = vld [vmem:[#allocation10 + $0x4] sm:$0xf]
        %v791 = vld [vmem:[#allocation10 + $0x8] sm:$0xf]
        %v792 = vld [vmem:[#allocation10 + $0xc] sm:$0xf]
        %v793 = vld [vmem:[#allocation10 + $0x10] sm:$0xf]
        %v794 = vld [vmem:[#allocation10 + $0x14] sm:$0xf]
        %v795 = vld [vmem:[#allocation10 + $0x18] sm:$0xf]
        %v796 = vld [vmem:[#allocation10 + $0x1c] sm:$0xf]
        %v797 = vld [vmem:[#allocation10 + $0x20] sm:$0xf]
        %v798 = vld [vmem:[#allocation10 + $0x24] sm:$0xf]
        %v799 = vld [vmem:[#allocation10 + $0x28] sm:$0xf]
        %v800 = vld [vmem:[#allocation10 + $0x2c] sm:$0xf]
        %v801 = vld [vmem:[#allocation10 + $0x30] sm:$0xf]
        %v802 = vld [vmem:[#allocation10 + $0x34] sm:$0xf]
        %v803 = vld [vmem:[#allocation10 + $0x38] sm:$0xf]
        %v804 = vld [vmem:[#allocation10 + $0x3c] sm:$0xf]
        %v805 = vld [vmem:[%s8] sm:$0x1]
        %v807 = vperm.slane %v805, 0
        %v825 = vunpack.c.l.b16 %v789
        %v826 = vunpack.c.l.b16 %v790
        %v827 = vunpack.c.l.b16 %v791
        %v828 = vunpack.c.l.b16 %v792
        %v829 = vunpack.c.l.b16 %v793
        %v830 = vunpack.c.l.b16 %v794
        %v831 = vunpack.c.l.b16 %v795
        %v832 = vunpack.c.l.b16 %v796
        %v833 = vunpack.c.l.b16 %v797
        %v834 = vunpack.c.l.b16 %v798
        %v835 = vunpack.c.l.b16 %v799
        %v836 = vunpack.c.l.b16 %v800
        %v837 = vunpack.c.l.b16 %v801
        %v838 = vunpack.c.l.b16 %v802
        %v839 = vunpack.c.l.b16 %v803
        %v840 = vunpack.c.l.b16 %v804
        %v841 = vpack.c.b16 %v826, %v825
        %v842 = vpack.c.b16 %v828, %v827
        %v843 = vpack.c.b16 %v830, %v829
        %v844 = vpack.c.b16 %v832, %v831
        %v845 = vpack.c.b16 %v834, %v833
        %v846 = vpack.c.b16 %v836, %v835
        %v847 = vpack.c.b16 %v838, %v837
        %v848 = vpack.c.b16 %v840, %v839
        %857 = vmatpush.bf16.msra.mxu0 %v848
        %858 = vmatpush.bf16.msra.mxu0 %v847
        %859 = vmatpush.bf16.msra.mxu0 %v846
        %860 = vmatpush.bf16.msra.mxu0 %v845
        %861 = vmatpush.bf16.msra.mxu0 %v844
        %862 = vmatpush.bf16.msra.mxu0 %v843
        %863 = vmatpush.bf16.msra.mxu0 %v842
        %864 = vmatpush.bf16.msra.mxu0 %v841
        %865 = vmatmul.bf16.gmra.mxu0 %v788
        %v866 = vpop.f32.mrf.mxu0
        %v867 = vadd.f32 %v807, %v866
        %v868 = vpop.f32.mrf.mxu0
        %869 = vdwg.mxu0
        %870 = vst [vmem:[%s415] sm:$0xff] %v867
        %s871 = sand.u32 %s230, 1
        %s872 = scalar_lea.sflag [#allocation4], %s871
        %s873 = sand.u32 %s230, 1
        %s874 = smul.addr %s873, 8
        %s875 = scalar_lea.vmem [#allocation11], %s874
        // Predicated region
        $region77: #{tpu_custom_call.1} parent=55 // pred_check
          %p876 = pneg %p240
        $region78: #{tpu_custom_call.1} parent=55 // pred_check_branch
          %878 = sbr.rel (%p876) target = $region80
        $region79: #{tpu_custom_call.1} parent=55 // pred_region
          %880 = vsyncadd %s872, 0
          %s881 = smul.addr %s28, 8
          %s882 = scalar_lea.hbm %s9, %s881
          %s884 = sshll.u32 %s875, 4
          %s885 = int_to_ptr.vmem [resolvable:$true] %s884
          %s886 = sshll.u32 %s882, 4
          %s887 = int_to_ptr.hbm [resolvable:$true] %s886
          %889 = dma.vmem_to_hbm [thread:$0]  %s885, 128, %s887, %s872
        $region80: #{tpu_custom_call.1} parent=55 // pred_fallthru
          _
      $region56: #{tpu_custom_call.1} parent=5 // pred_fallthru
        _
      %p890 = scmp.le.s32.totalorder 2, %s23
      // Predicated region
      $region81: #{tpu_custom_call.1} parent=5 // pred_check
        %p891 = pneg %p890
      $region82: #{tpu_custom_call.1} parent=5 // pred_check_branch
        %893 = sbr.rel (%p891) target = $region84
      $region83: #{tpu_custom_call.1} parent=5 // pred_region
        %s894 = ssub.s32 %s23, 2
        // Predicated region
        $region85: #{tpu_custom_call.1} parent=83 // pred_check
          %p895 = pneg %p246
        $region86: #{tpu_custom_call.1} parent=83 // pred_check_branch
          %897 = sbr.rel (%p895) target = $region88
        $region87: #{tpu_custom_call.1} parent=83 // pred_region
          %s898 = sand.u32 %s231, 1
          %s899 = scalar_lea.sflag [#allocation4], %s898
          %s900 = sand.u32 %s231, 1
          %s901 = smul.addr %s900, 8
          %s902 = scalar_lea.vmem [#allocation11], %s901
          %904 = dma.done %s899, 128
        $region88: #{tpu_custom_call.1} parent=83 // pred_fallthru
          _
      $region84: #{tpu_custom_call.1} parent=5 // pred_fallthru
        _
    $region6: #{tpu_custom_call.1} parent=1 // loop_footer
      %s27 = sadd.s32 1, %s23
    $region7: #{tpu_custom_call.1} parent=1 // loop_footer_branch
      %22 = sbr.rel target = $region3
    $region8: #{tpu_custom_call.1} parent=1 // loop_exit
      _
    %905 = vsyncpa [#allocation3], 1
    %s906 = scalar_lea.sflag [#allocation3], 1
    %907 = vsyncpa %s906, 1
    %908 = vsyncpa [#allocation6], 1
    %909 = vsyncpa [#allocation9], 1
    %910 = vsyncpa [#allocation4], 1
    %s911 = scalar_lea.sflag [#allocation4], 1
    %912 = vsyncpa %s911, 1

</llo_original>
